<compile_context>
chip_gen: v7x
topology: tpu7x:2x2x1
jax: 0.10.0
libtpu: 0.0.40
codegen_flags: <defaults>
</compile_context>

<pallas_src>
import functools

import jax
import jax.numpy as jnp
from jax.experimental import pallas as pl
from jax.experimental.pallas import tpu as pltpu

MAX_LOG_STD = 5.0
MIN_LOG_STD = -2.0


# ---------------------------------------------------------------------------
# Kernel
# ---------------------------------------------------------------------------
def _actor_critic_fused_kernel(
    x_ref,
    w_in_ref, b_in_ref,
    w_hid_ref, b_hid_ref,
    w_head_ref, b_head_ref,
    out_ref,
    *, action_dim,
):
    # bf16 operands on the MXU, f32 accumulation; activations stay f32 on the VPU/EUP.
    x = x_ref[...].astype(jnp.bfloat16)

    # h1 = [ tanh(x@w1+b1) | tanh(x@w5+b5) ]
    h1 = jnp.tanh(
        jnp.dot(x, w_in_ref[...], preferred_element_type=jnp.float32) + b_in_ref[...]
    )
    # h2 = [ tanh(a1@w2+b2) | tanh(v1@w6+b6) ]   (block-diagonal W_hid)
    h2 = jnp.tanh(
        jnp.dot(h1.astype(jnp.bfloat16), w_hid_ref[...],
                preferred_element_type=jnp.float32) + b_hid_ref[...]
    )
    # raw = [ mu | log_std | value | zero-pad... ]   (lane-padded to 128)
    raw = (
        jnp.dot(h2.astype(jnp.bfloat16), w_head_ref[...],
                preferred_element_type=jnp.float32)
        + b_head_ref[...]
    )

    # clamp+exp only on the sigma columns; mask BEFORE the exp so pad / mu /
    # value lanes never see a (possibly large) exponent argument.
    col = jax.lax.broadcasted_iota(jnp.int32, raw.shape, dimension=1)
    is_sigma = (col >= action_dim) & (col < 2 * action_dim)
    sig_arg = jnp.where(is_sigma, jnp.clip(raw, MIN_LOG_STD, MAX_LOG_STD), 0.0)
    out_ref[...] = jnp.where(is_sigma, jnp.exp(sig_arg), raw).astype(out_ref.dtype)


# ---------------------------------------------------------------------------
# One-time weight packing (outside the hot path)
# ---------------------------------------------------------------------------
def pack_params(p):
    """Pack the 7 Linear layers into 3 block-structured matmul operands.

    Weights -> bf16 (MXU operands), biases stay f32 (added to f32 accumulators).
    The head is lane-padded to a multiple of 128 output columns.
    """
    S, H = p["w1"].shape
    A = p["wmu"].shape[1]
    out_w = 2 * A + 1
    out_pad = ((out_w + 127) // 128) * 128

    w_in = jnp.concatenate([p["w1"], p["w5"]], axis=1).astype(jnp.bfloat16)   # (S, 2H)
    b_in = jnp.concatenate([p["b1"], p["b5"]], axis=1).astype(jnp.float32)    # (1, 2H)

    w_hid = jnp.zeros((2 * H, 2 * H), jnp.float32)
    w_hid = (
        w_hid.at[:H, :H].set(p["w2"]).at[H:, H:].set(p["w6"])
    ).astype(jnp.bfloat16)                                                    # (2H, 2H)
    b_hid = jnp.concatenate([p["b2"], p["b6"]], axis=1).astype(jnp.float32)   # (1, 2H)

    w_head = jnp.zeros((2 * H, out_pad), jnp.float32)
    w_head = (
        w_head.at[:H, :A].set(p["wmu"])
        .at[:H, A:2 * A].set(p["wsig"])
        .at[H:, 2 * A:out_w].set(p["wv"])
    ).astype(jnp.bfloat16)                                                    # (2H, out_pad)
    b_head = jnp.zeros((1, out_pad), jnp.float32)
    b_head = b_head.at[:, :out_w].set(
        jnp.concatenate([p["bmu"], p["bsig"], p["bv"]], axis=1)
    )                                                                         # (1, out_pad)

    return dict(
        w_in=w_in, b_in=b_in,
        w_hid=w_hid, b_hid=b_hid,
        w_head=w_head, b_head=b_head,
        state_dim=S, hidden_size=H, action_dim=A, out_pad=out_pad,
    )


# ---------------------------------------------------------------------------
# Wrapper
# ---------------------------------------------------------------------------
def _choose_block_b(B):
    """Batch block: single block for small B; otherwise >=2 blocks (megacore),
    8-row aligned, capped at 2048 rows to amortize per-grid-step overhead."""
    if B <= 256:
        return B
    half = pl.cdiv(B, 2)
    return min(((half + 7) // 8) * 8, 2048)


def actor_critic_norm(x, packed):
    """x: (B, S) float32. packed: output of pack_params. Returns (mu, std, value)."""
    B, S = x.shape
    A = packed["action_dim"]
    H = packed["hidden_size"]
    out_pad = packed["out_pad"]

    block_b = _choose_block_b(B)
    n_blocks = pl.cdiv(B, block_b)   # ragged last block handled by Pallas masking

    # Explicit BlockSpecs. Weights/biases always map to block (0,0) ->
    # VMEM-resident across the whole batch grid.
    x_spec = pl.BlockSpec((block_b, S), lambda i: (i, 0))
    w_in_spec = pl.BlockSpec((S, 2 * H), lambda i: (0, 0))
    b_in_spec = pl.BlockSpec((1, 2 * H), lambda i: (0, 0))
    w_hid_spec = pl.BlockSpec((2 * H, 2 * H), lambda i: (0, 0))
    b_hid_spec = pl.BlockSpec((1, 2 * H), lambda i: (0, 0))
    w_head_spec = pl.BlockSpec((2 * H, out_pad), lambda i: (0, 0))
    b_head_spec = pl.BlockSpec((1, out_pad), lambda i: (0, 0))
    out_spec = pl.BlockSpec((block_b, out_pad), lambda i: (i, 0))

    kernel = functools.partial(_actor_critic_fused_kernel, action_dim=A)

    # Advisory cost hint so XLA schedules around the call sensibly (matters
    # mostly for the tiny-batch / dispatch-dominated regime).
    flops = 2 * B * (S * 2 * H + (2 * H) * (2 * H) + (2 * H) * out_pad)
    transcendentals = B * (4 * H + out_pad)
    bytes_accessed = (
        x.size * x.dtype.itemsize
        + packed["w_in"].size * 2 + packed["w_hid"].size * 2 + packed["w_head"].size * 2
        + (packed["b_in"].size + packed["b_hid"].size + packed["b_head"].size) * 4
        + B * out_pad * 4
    )
    cost = pl.CostEstimate(
        flops=int(flops),
        transcendentals=int(transcendentals),
        bytes_accessed=int(bytes_accessed),
    )

    out = pl.pallas_call(
        kernel,
        out_shape=jax.ShapeDtypeStruct((B, out_pad), jnp.float32),
        grid=(n_blocks,),
        in_specs=[
            x_spec,
            w_in_spec, b_in_spec,
            w_hid_spec, b_hid_spec,
            w_head_spec, b_head_spec,
        ],
        out_specs=out_spec,
        compiler_params=pltpu.CompilerParams(
            dimension_semantics=("parallel",),
        ),
        cost_estimate=cost,
    )(
        x,
        packed["w_in"], packed["b_in"],
        packed["w_hid"], packed["b_hid"],
        packed["w_head"], packed["b_head"],
    )

    mu = out[:, :A]
    std = out[:, A:2 * A]
    value = out[:, 2 * A:2 * A + 1]
    return mu, std, value


# ---------------------------------------------------------------------------
# Parameter init (PyTorch nn.Linear-style uniform +/- 1/sqrt(fan_in)),
# stored as (in, out) weights and (1, out) biases, f32.
# ---------------------------------------------------------------------------
def init_params(key, state_dim, action_dim, hidden_size):
    def linear(k, fan_in, fan_out):
        kw, kb = jax.random.split(k)
        bound = 1.0 / jnp.sqrt(fan_in)
        w = jax.random.uniform(kw, (fan_in, fan_out), jnp.float32, -bound, bound)
        b = jax.random.uniform(kb, (1, fan_out), jnp.float32, -bound, bound)
        return w, b

    keys = jax.random.split(key, 7)
    w1, b1 = linear(keys[0], state_dim, hidden_size)
    w2, b2 = linear(keys[1], hidden_size, hidden_size)
    wmu, bmu = linear(keys[2], hidden_size, action_dim)
    wsig, bsig = linear(keys[3], hidden_size, action_dim)
    w5, b5 = linear(keys[4], state_dim, hidden_size)
    w6, b6 = linear(keys[5], hidden_size, hidden_size)
    wv, bv = linear(keys[6], hidden_size, 1)
    return dict(
        w1=w1, b1=b1, w2=w2, b2=b2, wmu=wmu, bmu=bmu, wsig=wsig, bsig=bsig,
        w5=w5, b5=b5, w6=w6, b6=b6, wv=wv, bv=bv,
    )


def reference_forward(x, p):
    a = jnp.tanh(x @ p["w1"] + p["b1"])
    a = jnp.tanh(a @ p["w2"] + p["b2"])
    mu = a @ p["wmu"] + p["bmu"]
    log_std = jnp.clip(a @ p["wsig"] + p["bsig"], MIN_LOG_STD, MAX_LOG_STD)
    v = jnp.tanh(x @ p["w5"] + p["b5"])
    v = jnp.tanh(v @ p["w6"] + p["b6"])
    value = v @ p["wv"] + p["bv"]
    return mu, jnp.exp(log_std), value


if __name__ == "__main__":
    # Small shapes consistent with the module's forward.
    state_dim, action_dim, hidden_size = 16, 4, 32

    key = jax.random.PRNGKey(0)
    kx, kp, kx2 = jax.random.split(key, 3)
    params = init_params(kp, state_dim, action_dim, hidden_size)
    packed = pack_params(params)  # one-time packing, outside the hot path

    # bf16 operands w/ f32 accumulation -> relaxed tolerances vs. f32 reference.
    TOL = dict(atol=5e-2, rtol=5e-2)

    # 1) Tiny-batch demo shape (single block).
    x = jax.random.normal(kx, (8, state_dim), dtype=jnp.float32)
    mu, std, value = actor_critic_norm(x, packed)
    jax.block_until_ready((mu, std, value))
    mu_ref, std_ref, value_ref = reference_forward(x, params)
    assert jnp.allclose(mu, mu_ref, **TOL), "mu mismatch (B=8)"
    assert jnp.allclose(std, std_ref, **TOL), "std mismatch (B=8)"
    assert jnp.allclose(value, value_ref, **TOL), "value mismatch (B=8)"

    # 2) Multi-block path with a ragged last block (exercises grid + masking).
    x2 = jax.random.normal(kx2, (300, state_dim), dtype=jnp.float32)
    mu2, std2, value2 = actor_critic_norm(x2, packed)
    jax.block_until_ready((mu2, std2, value2))
    mu2_ref, std2_ref, value2_ref = reference_forward(x2, params)
    assert jnp.allclose(mu2, mu2_ref, **TOL), "mu mismatch (B=300)"
    assert jnp.allclose(std2, std2_ref, **TOL), "std mismatch (B=300)"
    assert jnp.allclose(value2, value2_ref, **TOL), "value mismatch (B=300)"

    print("KERNEL_OK")
</pallas_src>

<mosaic_0001>
module attributes {stable_mosaic.version = 11 : i64} {
  func.func @_actor_critic_fused_kernel(%arg0: i32, %arg1: memref<8x16xf32, #tpu.memory_space<vmem>>, %arg2: memref<16x64xbf16, #tpu.memory_space<vmem>>, %arg3: memref<1x64xf32, #tpu.memory_space<vmem>>, %arg4: memref<64x64xbf16, #tpu.memory_space<vmem>>, %arg5: memref<1x64xf32, #tpu.memory_space<vmem>>, %arg6: memref<64x128xbf16, #tpu.memory_space<vmem>>, %arg7: memref<1x128xf32, #tpu.memory_space<vmem>>, %arg8: memref<8x128xf32, #tpu.memory_space<vmem>>) attributes {dimension_semantics = [#tpu.dimension_semantics<parallel>], iteration_bounds = array<i64: 1>, scalar_prefetch = 0 : i64, scratch_operands = 0 : i64, tpu.core_type = #tpu.core_type<tc>, window_params = [{transform_indices = @transform_0, window_bounds = array<i64: 8, 16>}, {pipeline_mode = #tpu.pipeline_mode<synchronous>, transform_indices = @transform_1, window_bounds = array<i64: 16, 64>}, {pipeline_mode = #tpu.pipeline_mode<synchronous>, transform_indices = @transform_2, window_bounds = array<i64: 1, 64>}, {pipeline_mode = #tpu.pipeline_mode<synchronous>, transform_indices = @transform_3, window_bounds = array<i64: 64, 64>}, {pipeline_mode = #tpu.pipeline_mode<synchronous>, transform_indices = @transform_4, window_bounds = array<i64: 1, 64>}, {pipeline_mode = #tpu.pipeline_mode<synchronous>, transform_indices = @transform_5, window_bounds = array<i64: 64, 128>}, {pipeline_mode = #tpu.pipeline_mode<synchronous>, transform_indices = @transform_6, window_bounds = array<i64: 1, 128>}, {transform_indices = @transform_7, window_bounds = array<i64: 8, 128>}]} {
    %c0 = arith.constant 0 : index
    %c0_0 = arith.constant 0 : index
    %0 = vector.load %arg1[%c0, %c0_0] : memref<8x16xf32, #tpu.memory_space<vmem>>, vector<8x16xf32>
    %1 = arith.truncf %0 : vector<8x16xf32> to vector<8x16xbf16>
    %c0_1 = arith.constant 0 : index
    %c0_2 = arith.constant 0 : index
    %2 = vector.load %arg2[%c0_1, %c0_2] : memref<16x64xbf16, #tpu.memory_space<vmem>>, vector<16x64xbf16>
    %cst = arith.constant dense<0.000000e+00> : vector<8x64xf32>
    %3 = tpu.matmul %1, %2, %cst {dimension_numbers = #tpu.dot_dimension_numbers<[1], [0], [0], [1], [0, 0, 1, 1], [], []>} : vector<8x16xbf16>, vector<16x64xbf16>, vector<8x64xf32> -> vector<8x64xf32>
    %c0_3 = arith.constant 0 : index
    %c0_4 = arith.constant 0 : index
    %4 = vector.load %arg3[%c0_3, %c0_4] : memref<1x64xf32, #tpu.memory_space<vmem>>, vector<1x64xf32>
    %5 = vector.broadcast %4 : vector<1x64xf32> to vector<8x64xf32>
    %6 = arith.addf %3, %5 : vector<8x64xf32>
    %7 = math.tanh %6 : vector<8x64xf32>
    %8 = arith.truncf %7 : vector<8x64xf32> to vector<8x64xbf16>
    %c0_5 = arith.constant 0 : index
    %c0_6 = arith.constant 0 : index
    %9 = vector.load %arg4[%c0_5, %c0_6] : memref<64x64xbf16, #tpu.memory_space<vmem>>, vector<64x64xbf16>
    %cst_7 = arith.constant dense<0.000000e+00> : vector<8x64xf32>
    %10 = tpu.matmul %8, %9, %cst_7 {dimension_numbers = #tpu.dot_dimension_numbers<[1], [0], [0], [1], [0, 0, 1, 1], [], []>} : vector<8x64xbf16>, vector<64x64xbf16>, vector<8x64xf32> -> vector<8x64xf32>
    %c0_8 = arith.constant 0 : index
    %c0_9 = arith.constant 0 : index
    %11 = vector.load %arg5[%c0_8, %c0_9] : memref<1x64xf32, #tpu.memory_space<vmem>>, vector<1x64xf32>
    %12 = vector.broadcast %11 : vector<1x64xf32> to vector<8x64xf32>
    %13 = arith.addf %10, %12 : vector<8x64xf32>
    %14 = math.tanh %13 : vector<8x64xf32>
    %15 = arith.truncf %14 : vector<8x64xf32> to vector<8x64xbf16>
    %c0_10 = arith.constant 0 : index
    %c0_11 = arith.constant 0 : index
    %16 = vector.load %arg6[%c0_10, %c0_11] : memref<64x128xbf16, #tpu.memory_space<vmem>>, vector<64x128xbf16>
    %cst_12 = arith.constant dense<0.000000e+00> : vector<8x128xf32>
    %17 = tpu.matmul %15, %16, %cst_12 {dimension_numbers = #tpu.dot_dimension_numbers<[1], [0], [0], [1], [0, 0, 1, 1], [], []>} : vector<8x64xbf16>, vector<64x128xbf16>, vector<8x128xf32> -> vector<8x128xf32>
    %c0_13 = arith.constant 0 : index
    %c0_14 = arith.constant 0 : index
    %18 = vector.load %arg7[%c0_13, %c0_14] : memref<1x128xf32, #tpu.memory_space<vmem>>, vector<1x128xf32>
    %19 = vector.broadcast %18 : vector<1x128xf32> to vector<8x128xf32>
    %20 = arith.addf %17, %19 : vector<8x128xf32>
    %21 = tpu.iota {dimensions = array<i32: 1>} : vector<8x128xi32>
    %c4_i32 = arith.constant 4 : i32
    %22 = vector.broadcast %c4_i32 : i32 to vector<8x128xi32>
    %23 = arith.cmpi sge, %21, %22 : vector<8x128xi32>
    %c8_i32 = arith.constant 8 : i32
    %24 = vector.broadcast %c8_i32 : i32 to vector<8x128xi32>
    %25 = arith.cmpi slt, %21, %24 : vector<8x128xi32>
    %26 = arith.andi %23, %25 : vector<8x128xi1>
    %cst_15 = arith.constant -2.000000e+00 : f32
    %cst_16 = arith.constant 5.000000e+00 : f32
    %27 = vector.broadcast %cst_15 : f32 to vector<8x128xf32>
    %28 = arith.maximumf %27, %20 : vector<8x128xf32>
    %29 = vector.broadcast %cst_16 : f32 to vector<8x128xf32>
    %30 = arith.minimumf %29, %28 : vector<8x128xf32>
    %cst_17 = arith.constant 0.000000e+00 : f32
    %31 = vector.broadcast %cst_17 : f32 to vector<8x128xf32>
    %32 = arith.select %26, %30, %31 : vector<8x128xi1>, vector<8x128xf32>
    %33 = math.exp %32 : vector<8x128xf32>
    %34 = arith.select %26, %33, %20 : vector<8x128xi1>, vector<8x128xf32>
    %c0_18 = arith.constant 0 : index
    %c0_19 = arith.constant 0 : index
    %35 = vector.load %arg8[%c0_18, %c0_19] : memref<8x128xf32, #tpu.memory_space<vmem>>, vector<8x128xf32>
    tpu.vector_store %arg8[%c0_18, %c0_19], %34 {strides = array<i32>} : memref<8x128xf32, #tpu.memory_space<vmem>>, vector<8x128xf32>,
    return
  }
  func.func @transform_0(%arg0: i32) -> (i32, i32) {
    %c0_i32 = arith.constant 0 : i32
    %c0_i32_0 = arith.constant 0 : i32
    return %arg0, %c0_i32 : i32, i32
  }
  func.func @transform_1(%arg0: i32) -> (i32, i32) {
    %c0_i32 = arith.constant 0 : i32
    %c0_i32_0 = arith.constant 0 : i32
    %c0_i32_1 = arith.constant 0 : i32
    return %c0_i32, %c0_i32_0 : i32, i32
  }
  func.func @transform_2(%arg0: i32) -> (i32, i32) {
    %c0_i32 = arith.constant 0 : i32
    %c0_i32_0 = arith.constant 0 : i32
    %c0_i32_1 = arith.constant 0 : i32
    return %c0_i32, %c0_i32_0 : i32, i32
  }
  func.func @transform_3(%arg0: i32) -> (i32, i32) {
    %c0_i32 = arith.constant 0 : i32
    %c0_i32_0 = arith.constant 0 : i32
    %c0_i32_1 = arith.constant 0 : i32
    return %c0_i32, %c0_i32_0 : i32, i32
  }
  func.func @transform_4(%arg0: i32) -> (i32, i32) {
    %c0_i32 = arith.constant 0 : i32
    %c0_i32_0 = arith.constant 0 : i32
    %c0_i32_1 = arith.constant 0 : i32
    return %c0_i32, %c0_i32_0 : i32, i32
  }
  func.func @transform_5(%arg0: i32) -> (i32, i32) {
    %c0_i32 = arith.constant 0 : i32
    %c0_i32_0 = arith.constant 0 : i32
    %c0_i32_1 = arith.constant 0 : i32
    return %c0_i32, %c0_i32_0 : i32, i32
  }
  func.func @transform_6(%arg0: i32) -> (i32, i32) {
    %c0_i32 = arith.constant 0 : i32
    %c0_i32_0 = arith.constant 0 : i32
    %c0_i32_1 = arith.constant 0 : i32
    return %c0_i32, %c0_i32_0 : i32, i32
  }
  func.func @transform_7(%arg0: i32) -> (i32, i32) {
    %c0_i32 = arith.constant 0 : i32
    %c0_i32_0 = arith.constant 0 : i32
    return %arg0, %c0_i32 : i32, i32
  }
}

</mosaic_0001>

<llo_original>
// kernel: tpu_custom_call.1
$region0: #{tpu_custom_call.1}
  #allocation0 [shape = 'u32[]', space=smem, size = 0x4, offset = 0x4, fixed_abs, tag = 'smem constant byte address 0x4 - core index']
  #allocation1 [shape = 'u32[144,128]{1,0:T(1,128)}', space=vmem, size = 0x12000, scoped, tag = 'internal scratch']
  %s0 = inlined_call_operand.hbm [shape: f32[8,16], index: 0, kind: input, shape index: {}]
  %s1 = inlined_call_operand.hbm [shape: bf16[16,64], index: 1, kind: input, shape index: {}]
  %s2 = inlined_call_operand.vmem [shape: f32[1,64], index: 2, kind: input, shape index: {}]
  %s3 = inlined_call_operand.hbm [shape: bf16[64,64], index: 3, kind: input, shape index: {}]
  %s4 = inlined_call_operand.vmem [shape: f32[1,64], index: 4, kind: input, shape index: {}]
  %s5 = inlined_call_operand.hbm [shape: bf16[64,128], index: 5, kind: input, shape index: {}]
  %s6 = inlined_call_operand.vmem [shape: f32[1,128], index: 6, kind: input, shape index: {}]
  %s7 = inlined_call_operand.hbm [shape: f32[8,128], index: 7, kind: output, shape index: {}]
  %s8 = sld [smem:[#allocation0]]
  $region54: #{tpu_custom_call.1} parent=0
    _
  %s10 = ssub.s32 1, %s8
  %s11 = scalar_select 0, %s10, %s8
  $region1: #{tpu_custom_call.1} parent=0
    #allocation2 [shape = 'u8[4096]{0}', space=vmem, size = 0x1000, scoped, tag = 'input window, operand 0, single buffered']
    #allocation3 [shape = 's32[1]{0}', space=sflag, size = 0x4, scoped, tag = 'scoped memory for tpu_custom_call.1']
    #allocation4 [shape = 's32[1]{0}', space=sflag, size = 0x4, scoped, tag = 'scoped memory for tpu_custom_call.1']
    #allocation5 [shape = 'u8[4096]{0}', space=vmem, size = 0x1000, scoped, tag = 'input window, operand 1, single buffered']
    #allocation6 [shape = 's32[1]{0}', space=sflag, size = 0x4, scoped, tag = 'scoped memory for tpu_custom_call.1']
    #allocation7 [shape = 'u8[16384]{0}', space=vmem, size = 0x4000, scoped, tag = 'input window, operand 3, single buffered']
    #allocation8 [shape = 'u8[16384]{0}', space=vmem, size = 0x4000, scoped, tag = 'input window, operand 5, single buffered']
    #allocation9 [shape = 's32[1]{0}', space=sflag, size = 0x4, scoped, tag = 'scoped memory for tpu_custom_call.1']
    #allocation10 [shape = 'u8[4096]{0}', space=vmem, size = 0x1000, scoped, tag = 'output window, operand 0, single buffered']
    %12 = vsyncpa [#allocation3], 0
    %13 = vsyncpa [#allocation6], 0
    %14 = vsyncpa [#allocation9], 0
    %15 = vsyncpa [#allocation4], 0
    // Predicated region
    $region2: #{tpu_custom_call.1} parent=1 // pred_check
      _
    $region3: #{tpu_custom_call.1} parent=1 // pred_check_branch
      %17 = sbr.rel (0) target = $region5
    $region4: #{tpu_custom_call.1} parent=1 // pred_region
      %s19 = ssub.s32 128, 128
      %20 = vsyncadd [#allocation3], %s19
      %s22 = sshll.u32 [#allocation2], 4
      %s23 = int_to_ptr.vmem [resolvable:$true] %s22
      %25 = dma.hbm_to_vmem [thread:$0]  %s0, 128, %s23, [#allocation3]
    $region5: #{tpu_custom_call.1} parent=1 // pred_fallthru
      _
    // Predicated region
    $region6: #{tpu_custom_call.1} parent=1 // pred_check
      _
    $region7: #{tpu_custom_call.1} parent=1 // pred_check_branch
      %27 = sbr.rel (0) target = $region9
    $region8: #{tpu_custom_call.1} parent=1 // pred_region
      %s29 = ssub.s32 128, 128
      %30 = vsyncadd [#allocation6], %s29
      %s31 = sshll.u32 [#allocation5], 4
      %s32 = int_to_ptr.vmem [resolvable:$true] %s31
      %37 = dma.hbm_to_vmem [thread:$0]  %s1, 128, %s32, [#allocation6], 64, 64, 4
    $region9: #{tpu_custom_call.1} parent=1 // pred_fallthru
      _
    // Predicated region
    $region10: #{tpu_custom_call.1} parent=1 // pred_check
      _
    $region11: #{tpu_custom_call.1} parent=1 // pred_check_branch
      %39 = sbr.rel (0) target = $region13
    $region12: #{tpu_custom_call.1} parent=1 // pred_region
      _
    $region13: #{tpu_custom_call.1} parent=1 // pred_fallthru
      _
    // Predicated region
    $region14: #{tpu_custom_call.1} parent=1 // pred_check
      _
    $region15: #{tpu_custom_call.1} parent=1 // pred_check_branch
      %41 = sbr.rel (0) target = $region17
    $region16: #{tpu_custom_call.1} parent=1 // pred_region
      %s43 = ssub.s32 512, 512
      %44 = vsyncadd [#allocation6], %s43
      %s45 = sshll.u32 [#allocation7], 4
      %s46 = int_to_ptr.vmem [resolvable:$true] %s45
      %51 = dma.hbm_to_vmem [thread:$0]  %s3, 512, %s46, [#allocation6], 64, 64, 4
    $region17: #{tpu_custom_call.1} parent=1 // pred_fallthru
      _
    // Predicated region
    $region18: #{tpu_custom_call.1} parent=1 // pred_check
      _
    $region19: #{tpu_custom_call.1} parent=1 // pred_check_branch
      %53 = sbr.rel (0) target = $region21
    $region20: #{tpu_custom_call.1} parent=1 // pred_region
      _
    $region21: #{tpu_custom_call.1} parent=1 // pred_fallthru
      _
    // Predicated region
    $region22: #{tpu_custom_call.1} parent=1 // pred_check
      _
    $region23: #{tpu_custom_call.1} parent=1 // pred_check_branch
      %55 = sbr.rel (0) target = $region25
    $region24: #{tpu_custom_call.1} parent=1 // pred_region
      %s57 = ssub.s32 512, 512
      %58 = vsyncadd [#allocation9], %s57
      %s59 = sshll.u32 [#allocation8], 4
      %s60 = int_to_ptr.vmem [resolvable:$true] %s59
      %65 = dma.hbm_to_vmem [thread:$0]  %s5, 512, %s60, [#allocation9], 64, 64, 4
    $region25: #{tpu_custom_call.1} parent=1 // pred_fallthru
      _
    // Predicated region
    $region26: #{tpu_custom_call.1} parent=1 // pred_check
      _
    $region27: #{tpu_custom_call.1} parent=1 // pred_check_branch
      %67 = sbr.rel (0) target = $region29
    $region28: #{tpu_custom_call.1} parent=1 // pred_region
      _
    $region29: #{tpu_custom_call.1} parent=1 // pred_fallthru
      _
    // Predicated region
    $region30: #{tpu_custom_call.1} parent=1 // pred_check
      _
    $region31: #{tpu_custom_call.1} parent=1 // pred_check_branch
      %69 = sbr.rel (0) target = $region33
    $region32: #{tpu_custom_call.1} parent=1 // pred_region
      %70 = dma.done [#allocation3], 128
    $region33: #{tpu_custom_call.1} parent=1 // pred_fallthru
      _
    // Predicated region
    $region34: #{tpu_custom_call.1} parent=1 // pred_check
      _
    $region35: #{tpu_custom_call.1} parent=1 // pred_check_branch
      %72 = sbr.rel (0) target = $region37
    $region36: #{tpu_custom_call.1} parent=1 // pred_region
      %73 = dma.done [#allocation6], 128
    $region37: #{tpu_custom_call.1} parent=1 // pred_fallthru
      _
    // Predicated region
    $region38: #{tpu_custom_call.1} parent=1 // pred_check
      _
    $region39: #{tpu_custom_call.1} parent=1 // pred_check_branch
      %75 = sbr.rel (0) target = $region41
    $region40: #{tpu_custom_call.1} parent=1 // pred_region
      %76 = dma.done [#allocation6], 512
    $region41: #{tpu_custom_call.1} parent=1 // pred_fallthru
      _
    // Predicated region
    $region42: #{tpu_custom_call.1} parent=1 // pred_check
      _
    $region43: #{tpu_custom_call.1} parent=1 // pred_check_branch
      %78 = sbr.rel (0) target = $region45
    $region44: #{tpu_custom_call.1} parent=1 // pred_region
      %79 = dma.done [#allocation9], 512
    $region45: #{tpu_custom_call.1} parent=1 // pred_fallthru
      _
    %v81 = vld [vmem:[#allocation2] sm:$0xff]
    %v82 = vpack.c.bf16 %v81, %v81
    %v83 = vld [vmem:[#allocation5] sm:$0xf]
    %v84 = vld [vmem:[#allocation5 + $0x4] sm:$0xf]
    %v85 = vld [vmem:[%s2] sm:$0x1]
    %v87 = vlaneseq
    %v88 = vshrl.u32 %v87, 7
    %v89 = vsub.s32 0, %v88
    %v90 = vrot.slane %v85, %v89
    %v94 = vunpack.c.l.b16 %v83
    %v95 = vunpack.c.l.b16 %v84
    %v96 = vpack.c.b16 %v95, %v94
    %vm98 = vcmask 130048
    %v100 = vsel %vm98, %v82, 0
    %102 = vmatprep.subr.bf16.mxu0 0
    %103 = vmatpush1.bf16.msra.mxu0 %v96
    %104 = vmatprep.subr.bf16.mxu0 0
    %105 = vmatpush1.bf16.msra.mxu0 0
    %106 = vmatprep.subr.bf16.mxu0 0
    %107 = vmatpush1.bf16.msra.mxu0 0
    %108 = vmatprep.subr.bf16.mxu0 0
    %109 = vmatpush1.bf16.msra.mxu0 0
    %110 = vmatprep.subr.bf16.mxu0 0
    %111 = vmatpush1.bf16.msra.mxu0 0
    %112 = vmatprep.subr.bf16.mxu0 0
    %113 = vmatpush1.bf16.msra.mxu0 0
    %114 = vmatprep.subr.bf16.mxu0 0
    %115 = vmatpush1.bf16.msra.mxu0 0
    %116 = vmatprep.subr.bf16.mxu0 0
    %117 = vmatpush1.bf16.msra.mxu0 0
    %118 = vmatprep.subr.bf16.mxu0 0
    %119 = vmatpush1.bf16.msra.mxu0 0
    %120 = vmatprep.subr.bf16.mxu0 0
    %121 = vmatpush1.bf16.msra.mxu0 0
    %122 = vmatprep.subr.bf16.mxu0 0
    %123 = vmatpush1.bf16.msra.mxu0 0
    %124 = vmatprep.subr.bf16.mxu0 0
    %125 = vmatpush1.bf16.msra.mxu0 0
    %126 = vmatprep.subr.bf16.mxu0 0
    %127 = vmatpush1.bf16.msra.mxu0 0
    %128 = vmatprep.subr.bf16.mxu0 0
    %129 = vmatpush1.bf16.msra.mxu0 0
    %130 = vmatprep.subr.bf16.mxu0 0
    %131 = vmatpush1.bf16.msra.mxu0 0
    %132 = vmatprep.subr.bf16.mxu0 0
    %133 = vmatpush1.bf16.msra.mxu0 0
    %134 = vmatprep.mubr.bf16.mxu0 0
    %135 = vmatmul.mubr.bf16.gmra.mrb[0].mxu0 %v100
    %v136 = vpop.f32.mrb[0].mxu0
    %v137 = vadd.f32 %v90, %v136
    %v138 = vpop.f32.mrb[0].mxu0
    %v139 = vpop.f32.mrb[0].mxu0
    %v140 = vpop.f32.mrb[0].mxu0
    %141 = vdwg.mxu0
    %v142 = vtanh.pop %v137
    %v143 = vpack.c.bf16 %v142, %v142
    %v144 = vld [vmem:[#allocation7] sm:$0xf]
    %v145 = vld [vmem:[#allocation7 + $0x4] sm:$0xf]
    %v146 = vld [vmem:[#allocation7 + $0x8] sm:$0xf]
    %v147 = vld [vmem:[#allocation7 + $0xc] sm:$0xf]
    %v148 = vld [vmem:[#allocation7 + $0x10] sm:$0xf]
    %v149 = vld [vmem:[#allocation7 + $0x14] sm:$0xf]
    %v150 = vld [vmem:[#allocation7 + $0x18] sm:$0xf]
    %v151 = vld [vmem:[#allocation7 + $0x1c] sm:$0xf]
    %v152 = vld [vmem:[%s4] sm:$0x1]
    %v154 = vlaneseq
    %v155 = vshrl.u32 %v154, 7
    %v156 = vsub.s32 0, %v155
    %v157 = vrot.slane %v152, %v156
    %v167 = vunpack.c.l.b16 %v144
    %v168 = vunpack.c.l.b16 %v145
    %v169 = vunpack.c.l.b16 %v146
    %v170 = vunpack.c.l.b16 %v147
    %v171 = vunpack.c.l.b16 %v148
    %v172 = vunpack.c.l.b16 %v149
    %v173 = vunpack.c.l.b16 %v150
    %v174 = vunpack.c.l.b16 %v151
    %v175 = vpack.c.b16 %v168, %v167
    %v176 = vpack.c.b16 %v170, %v169
    %v177 = vpack.c.b16 %v172, %v171
    %v178 = vpack.c.b16 %v174, %v173
    %vm183 = vcmask 523264
    %v185 = vsel %vm183, %v143, 0
    %187 = vmatprep.subr.bf16.mxu0 0
    %188 = vmatpush1.bf16.msra.mxu0 %v175
    %189 = vmatprep.subr.bf16.mxu0 0
    %190 = vmatpush1.bf16.msra.mxu0 %v176
    %191 = vmatprep.subr.bf16.mxu0 0
    %192 = vmatpush1.bf16.msra.mxu0 %v177
    %193 = vmatprep.subr.bf16.mxu0 0
    %194 = vmatpush1.bf16.msra.mxu0 %v178
    %195 = vmatprep.subr.bf16.mxu0 0
    %196 = vmatpush1.bf16.msra.mxu0 0
    %197 = vmatprep.subr.bf16.mxu0 0
    %198 = vmatpush1.bf16.msra.mxu0 0
    %199 = vmatprep.subr.bf16.mxu0 0
    %200 = vmatpush1.bf16.msra.mxu0 0
    %201 = vmatprep.subr.bf16.mxu0 0
    %202 = vmatpush1.bf16.msra.mxu0 0
    %203 = vmatprep.subr.bf16.mxu0 0
    %204 = vmatpush1.bf16.msra.mxu0 0
    %205 = vmatprep.subr.bf16.mxu0 0
    %206 = vmatpush1.bf16.msra.mxu0 0
    %207 = vmatprep.subr.bf16.mxu0 0
    %208 = vmatpush1.bf16.msra.mxu0 0
    %209 = vmatprep.subr.bf16.mxu0 0
    %210 = vmatpush1.bf16.msra.mxu0 0
    %211 = vmatprep.subr.bf16.mxu0 0
    %212 = vmatpush1.bf16.msra.mxu0 0
    %213 = vmatprep.subr.bf16.mxu0 0
    %214 = vmatpush1.bf16.msra.mxu0 0
    %215 = vmatprep.subr.bf16.mxu0 0
    %216 = vmatpush1.bf16.msra.mxu0 0
    %217 = vmatprep.subr.bf16.mxu0 0
    %218 = vmatpush1.bf16.msra.mxu0 0
    %219 = vmatprep.mubr.bf16.mxu0 0
    %220 = vmatmul.mubr.bf16.gmra.mrb[0].mxu0 %v185
    %v221 = vpop.f32.mrb[0].mxu0
    %v222 = vadd.f32 %v157, %v221
    %v223 = vpop.f32.mrb[0].mxu0
    %v224 = vpop.f32.mrb[0].mxu0
    %v225 = vpop.f32.mrb[0].mxu0
    %226 = vdwg.mxu0
    %v227 = vtanh.pop %v222
    %v228 = vpack.c.bf16 %v227, %v227
    %v229 = vld [vmem:[#allocation8] sm:$0xf]
    %v230 = vld [vmem:[#allocation8 + $0x4] sm:$0xf]
    %v231 = vld [vmem:[#allocation8 + $0x8] sm:$0xf]
    %v232 = vld [vmem:[#allocation8 + $0xc] sm:$0xf]
    %v233 = vld [vmem:[#allocation8 + $0x10] sm:$0xf]
    %v234 = vld [vmem:[#allocation8 + $0x14] sm:$0xf]
    %v235 = vld [vmem:[#allocation8 + $0x18] sm:$0xf]
    %v236 = vld [vmem:[#allocation8 + $0x1c] sm:$0xf]
    %v237 = vld [vmem:[%s6] sm:$0x1]
    %v239 = vlaneseq
    %v240 = vshrl.u32 %v239, 7
    %v241 = vsub.s32 0, %v240
    %v242 = vrot.slane %v237, %v241
    %v252 = vunpack.c.l.b16 %v229
    %v253 = vunpack.c.l.b16 %v230
    %v254 = vunpack.c.l.b16 %v231
    %v255 = vunpack.c.l.b16 %v232
    %v256 = vunpack.c.l.b16 %v233
    %v257 = vunpack.c.l.b16 %v234
    %v258 = vunpack.c.l.b16 %v235
    %v259 = vunpack.c.l.b16 %v236
    %v260 = vpack.c.b16 %v253, %v252
    %v261 = vpack.c.b16 %v255, %v254
    %v262 = vpack.c.b16 %v257, %v256
    %v263 = vpack.c.b16 %v259, %v258
    %v269 = vsel %vm183, %v228, 0
    %271 = vmatprep.subr.bf16.mxu0 0
    %272 = vmatpush1.bf16.msra.mxu0 %v260
    %273 = vmatprep.subr.bf16.mxu0 0
    %274 = vmatpush1.bf16.msra.mxu0 %v261
    %275 = vmatprep.subr.bf16.mxu0 0
    %276 = vmatpush1.bf16.msra.mxu0 %v262
    %277 = vmatprep.subr.bf16.mxu0 0
    %278 = vmatpush1.bf16.msra.mxu0 %v263
    %279 = vmatprep.subr.bf16.mxu0 0
    %280 = vmatpush1.bf16.msra.mxu0 0
    %281 = vmatprep.subr.bf16.mxu0 0
    %282 = vmatpush1.bf16.msra.mxu0 0
    %283 = vmatprep.subr.bf16.mxu0 0
    %284 = vmatpush1.bf16.msra.mxu0 0
    %285 = vmatprep.subr.bf16.mxu0 0
    %286 = vmatpush1.bf16.msra.mxu0 0
    %287 = vmatprep.subr.bf16.mxu0 0
    %288 = vmatpush1.bf16.msra.mxu0 0
    %289 = vmatprep.subr.bf16.mxu0 0
    %290 = vmatpush1.bf16.msra.mxu0 0
    %291 = vmatprep.subr.bf16.mxu0 0
    %292 = vmatpush1.bf16.msra.mxu0 0
    %293 = vmatprep.subr.bf16.mxu0 0
    %294 = vmatpush1.bf16.msra.mxu0 0
    %295 = vmatprep.subr.bf16.mxu0 0
    %296 = vmatpush1.bf16.msra.mxu0 0
    %297 = vmatprep.subr.bf16.mxu0 0
    %298 = vmatpush1.bf16.msra.mxu0 0
    %299 = vmatprep.subr.bf16.mxu0 0
    %300 = vmatpush1.bf16.msra.mxu0 0
    %301 = vmatprep.subr.bf16.mxu0 0
    %302 = vmatpush1.bf16.msra.mxu0 0
    %303 = vmatprep.mubr.bf16.mxu0 0
    %304 = vmatmul.mubr.bf16.gmra.mrb[0].mxu0 %v269
    %v305 = vpop.f32.mrb[0].mxu0
    %v306 = vadd.f32 %v242, %v305
    %v307 = vpop.f32.mrb[0].mxu0
    %v308 = vpop.f32.mrb[0].mxu0
    %v309 = vpop.f32.mrb[0].mxu0
    %310 = vdwg.mxu0
    %v311 = vlaneseq
    %v312 = vand.u32 %v311, 127
    %vm313 = vcmp.ge.s32.totalorder %v312, 4
    %vm314 = vcmp.lt.s32.totalorder %v312, 8
    %vm315 = vmand %vm313, %vm314
    %v316 = vmax.f32 %v306, -2.0
    %v317 = vmin.f32 %v316, 5.0
    %v318 = vsel %vm315, %v317, 0.0
    %v319 = vmul.f32 %v318, 1.442695
    %v320 = vpow.pop %v319
    %v321 = vsel %vm315, %v320, %v306
    %322 = vst [vmem:[#allocation10] sm:$0xff] %v321
    // Predicated region
    $region46: #{tpu_custom_call.1} parent=1 // pred_check
      _
    $region47: #{tpu_custom_call.1} parent=1 // pred_check_branch
      %324 = sbr.rel (0) target = $region49
    $region48: #{tpu_custom_call.1} parent=1 // pred_region
      %s326 = ssub.s32 128, 128
      %327 = vsyncadd [#allocation4], %s326
      %s329 = sshll.u32 [#allocation10], 4
      %s330 = int_to_ptr.vmem [resolvable:$true] %s329
      %332 = dma.vmem_to_hbm [thread:$0]  %s330, 128, %s7, [#allocation4]
    $region49: #{tpu_custom_call.1} parent=1 // pred_fallthru
      _
    // Predicated region
    $region50: #{tpu_custom_call.1} parent=1 // pred_check
      _
    $region51: #{tpu_custom_call.1} parent=1 // pred_check_branch
      %334 = sbr.rel (0) target = $region53
    $region52: #{tpu_custom_call.1} parent=1 // pred_region
      %335 = dma.done [#allocation4], 128
    $region53: #{tpu_custom_call.1} parent=1 // pred_fallthru
      _
    %336 = vsyncpa [#allocation3], 1
    %337 = vsyncpa [#allocation6], 1
    %338 = vsyncpa [#allocation9], 1
    %339 = vsyncpa [#allocation4], 1

</llo_original>
